<compile_context>
chip_gen: v6e
topology: v6e:2x2x1
jax: 0.10.0
libtpu: 0.0.40
codegen_flags: <defaults>
</compile_context>

<pallas_src>
import math
import jax
import jax.numpy as jnp
from jax import lax
from jax.experimental import pallas as pl
from jax.experimental.pallas import tpu as pltpu


def adaptive_attention_kernel(vis_ref, hs_ref, wv_ref, w3_ref, out_ref):
    """Single-program kernel; whole problem lives in VMEM.

    vis_ref : (B, H, L)   visual features in the original PyTorch NCL layout
    hs_ref  : (2B, H)     rows [0:B] = hidden (states[0]), rows [B:2B] = sentinel
    wv_ref  : (H, H)      comp_visual weight, PyTorch (out, in) layout (NOT transposed)
    w3_ref  : (3, H)      rows: comp_hidden w, comp_sentinel w, output_layer w
    out_ref : (B, L + 1)  softmax attention weights
    """
    B, H, L = vis_ref.shape

    # NCL -> NLH inside the kernel, then flatten to a single 2-D MXU matmul.
    feat = jnp.transpose(vis_ref[...], (0, 2, 1)).reshape(B * L, H)   # (B*L, H)
    wv = wv_ref[...]                                                  # (H, H)
    # Linear(x) = x @ W^T  -> contract feat axis 1 with wv axis 1 (no wv.T buffer).
    V = lax.dot_general(feat, wv,
                        dimension_numbers=(((1,), (1,)), ((), ())),
                        preferred_element_type=jnp.float32)           # (B*L, H)
    V = V.reshape(B, L, H)

    hid = hs_ref[0:B, :]            # (B, H)
    sen = hs_ref[B:2 * B, :]        # (B, H)
    wh = w3_ref[0:1, :]             # (1, H)
    ws = w3_ref[1:2, :]             # (1, H)
    wo = w3_ref[2:3, :]             # (1, H)

    # comp_hidden(hidden): (B, 1)
    hproj = jnp.sum(hid * wh, axis=-1, keepdims=True)

    # Z = tanh(V + Hp), Hp broadcast as (B, 1, 1)
    Z = jnp.tanh(V + hproj[:, :, None])                               # (B, L, H)

    # output_layer(Z).squeeze(2): (B, L)
    z = jnp.sum(Z * wo[None, :, :], axis=-1)

    # sentinel branch: (B, 1)
    sproj = jnp.sum(sen * ws, axis=-1, keepdims=True)
    s = jnp.tanh(sproj + hproj)

    # softmax over the virtual concat [z, s] without a lane-axis concat:
    m = jnp.maximum(jnp.max(z, axis=-1, keepdims=True), s)            # (B, 1)
    ez = jnp.exp(z - m)                                               # (B, L)
    es = jnp.exp(s - m)                                               # (B, 1)
    inv_d = 1.0 / (jnp.sum(ez, axis=-1, keepdims=True) + es)          # (B, 1)
    out_ref[:, 0:L] = ez * inv_d
    out_ref[:, L:L + 1] = es * inv_d


def adaptive_attention_2d(visual_inputs, states, sentinel, params):
    """visual_inputs: (B, hidden_size, visual_flat)  (PyTorch NCL layout)
       states: tuple, states[0] = hidden (B, hidden_size)
       sentinel: (B, hidden_size)
       params: (wv (H,H), wh (1,H), ws (1,H), wo (1,H))  -- PyTorch Linear weights (bias=False)
    """
    wv, wh, ws, wo = params
    hidden = states[0]
    B, H, L = visual_inputs.shape

    vis = visual_inputs.astype(jnp.float32)
    hs = jnp.concatenate([hidden, sentinel], axis=0).astype(jnp.float32)   # (2B, H)
    w3 = jnp.concatenate([wh, ws, wo], axis=0).astype(jnp.float32)         # (3, H)
    wv = wv.astype(jnp.float32)

    f32 = 4
    cost = pl.CostEstimate(
        flops=2 * B * L * H * H + 6 * B * L * H,          # MXU matmul + elementwise
        transcendentals=B * L * H + B * (L + 2),          # tanh + exp
        bytes_accessed=(vis.size + hs.size + wv.size + w3.size + B * (L + 1)) * f32,
    )

    # Tiny problem (a few KB) -> single program, whole arrays resident in VMEM.
    out = pl.pallas_call(
        adaptive_attention_kernel,
        out_shape=jax.ShapeDtypeStruct((B, L + 1), jnp.float32),
        in_specs=[pl.BlockSpec(memory_space=pltpu.MemorySpace.VMEM)] * 4,
        out_specs=pl.BlockSpec(memory_space=pltpu.MemorySpace.VMEM),
        cost_estimate=cost,
    )(vis, hs, wv, w3)
    return out


def reference_forward(visual_inputs, states, sentinel, params):
    """Pure-JAX reference mirroring the PyTorch module (bias=False Linears)."""
    wv, wh, ws, wo = params
    hidden = states[0]
    feature = jnp.transpose(visual_inputs, (0, 2, 1))          # (B, L, H)
    V = feature @ wv.T                                          # (B, L, H)
    Hp = (hidden @ wh.T)[:, None, :]                            # (B, 1, 1)
    Z = jnp.tanh(V + Hp)
    z = (Z @ wo.T)[..., 0]                                      # (B, L)
    S = jnp.tanh(sentinel @ ws.T + hidden @ wh.T)               # (B, 1)
    logits = jnp.concatenate([z, S], axis=1)
    return jax.nn.softmax(logits, axis=1)


if __name__ == "__main__":
    # Module config: visual_channels == hidden_size (required by Linear on permuted dim).
    B = 2
    hidden_size = 32
    visual_flat = 16           # e.g. a 4x4 spatial map flattened

    key = jax.random.PRNGKey(0)
    k_vis, k_hid, k_sen, k_wv, k_wh, k_ws, k_wo = jax.random.split(key, 7)

    # Inputs (PyTorch layout: (B, hidden_size, visual_flat)).
    visual_inputs = jax.random.normal(k_vis, (B, hidden_size, visual_flat), jnp.float32)
    hidden = jax.random.normal(k_hid, (B, hidden_size), jnp.float32)
    cell = jnp.zeros((B, hidden_size), jnp.float32)             # unused (states[1])
    states = (hidden, cell)
    sentinel = jax.random.normal(k_sen, (B, hidden_size), jnp.float32)

    # Deterministic parameter init matching reset_parameters():
    #   stdv = 1/sqrt(weight.size(0)); uniform(-stdv, stdv)   (all Linears bias=False)
    stdv_v = 1.0 / math.sqrt(hidden_size)      # comp_visual weight: (H, H) -> size(0)=H
    stdv_1 = 1.0                               # (1, H) weights -> size(0)=1
    wv = jax.random.uniform(k_wv, (hidden_size, hidden_size), jnp.float32, -stdv_v, stdv_v)
    wh = jax.random.uniform(k_wh, (1, hidden_size), jnp.float32, -stdv_1, stdv_1)
    ws = jax.random.uniform(k_ws, (1, hidden_size), jnp.float32, -stdv_1, stdv_1)
    wo = jax.random.uniform(k_wo, (1, hidden_size), jnp.float32, -stdv_1, stdv_1)
    params = (wv, wh, ws, wo)

    out = jax.jit(adaptive_attention_2d)(visual_inputs, states, sentinel, params)
    out = jax.block_until_ready(out)

    ref = reference_forward(visual_inputs, states, sentinel, params)
    assert out.shape == (B, visual_flat + 1), out.shape
    assert jnp.allclose(out, ref, atol=1e-5, rtol=1e-5), (out, ref)
    assert jnp.allclose(jnp.sum(out, axis=1), jnp.ones((B,)), atol=1e-5)

    print("KERNEL_OK")
</pallas_src>

<mosaic_0001>
module attributes {stable_mosaic.version = 11 : i64} {
  func.func @adaptive_attention_kernel(%arg0: memref<2x32x16xf32, #tpu.memory_space<vmem>>, %arg1: memref<4x32xf32, #tpu.memory_space<vmem>>, %arg2: memref<32x32xf32, #tpu.memory_space<vmem>>, %arg3: memref<3x32xf32, #tpu.memory_space<vmem>>, %arg4: memref<2x17xf32, #tpu.memory_space<vmem>>) attributes {dimension_semantics = [], scalar_prefetch = 0 : i64, scratch_operands = 0 : i64, tpu.core_type = #tpu.core_type<tc>} {
    %c0 = arith.constant 0 : index
    %c0_0 = arith.constant 0 : index
    %c0_1 = arith.constant 0 : index
    %0 = vector.load %arg0[%c0, %c0_0, %c0_1] : memref<2x32x16xf32, #tpu.memory_space<vmem>>, vector<2x32x16xf32>
    %1 = tpu.transpose %0, [0, 2, 1] : vector<2x32x16xf32> -> vector<2x16x32xf32>
    %2 = vector.shape_cast %1 : vector<2x16x32xf32> to vector<32x32xf32>
    %c0_2 = arith.constant 0 : index
    %c0_3 = arith.constant 0 : index
    %3 = vector.load %arg2[%c0_2, %c0_3] : memref<32x32xf32, #tpu.memory_space<vmem>>, vector<32x32xf32>
    %cst = arith.constant dense<0.000000e+00> : vector<32x32xf32>
    %4 = tpu.matmul %2, %3, %cst {dimension_numbers = #tpu.dot_dimension_numbers<[1], [1], [0], [0], [0, 0, 1, 0], [], []>} : vector<32x32xf32>, vector<32x32xf32>, vector<32x32xf32> -> vector<32x32xf32>
    %5 = vector.shape_cast %4 : vector<32x32xf32> to vector<2x16x32xf32>
    %c0_4 = arith.constant 0 : index
    %c0_5 = arith.constant 0 : index
    %6 = vector.load %arg1[%c0_4, %c0_5] : memref<4x32xf32, #tpu.memory_space<vmem>>, vector<2x32xf32>
    %c2 = arith.constant 2 : index
    %c0_6 = arith.constant 0 : index
    %7 = vector.load %arg1[%c2, %c0_6] : memref<4x32xf32, #tpu.memory_space<vmem>>, vector<2x32xf32>
    %c0_7 = arith.constant 0 : index
    %c0_8 = arith.constant 0 : index
    %8 = vector.load %arg3[%c0_7, %c0_8] : memref<3x32xf32, #tpu.memory_space<vmem>>, vector<1x32xf32>
    %c1 = arith.constant 1 : index
    %c0_9 = arith.constant 0 : index
    %9 = vector.load %arg3[%c1, %c0_9] : memref<3x32xf32, #tpu.memory_space<vmem>>, vector<1x32xf32>
    %c2_10 = arith.constant 2 : index
    %c0_11 = arith.constant 0 : index
    %10 = vector.load %arg3[%c2_10, %c0_11] : memref<3x32xf32, #tpu.memory_space<vmem>>, vector<1x32xf32>
    %11 = vector.broadcast %8 : vector<1x32xf32> to vector<2x32xf32>
    %12 = arith.mulf %6, %11 : vector<2x32xf32>
    %cst_12 = arith.constant dense<0.000000e+00> : vector<2xf32>
    %13 = vector.multi_reduction <add>, %12, %cst_12 [1] : vector<2x32xf32> to vector<2xf32>
    %14 = vector.shape_cast %13 : vector<2xf32> to vector<2x1xf32>
    %15 = vector.shape_cast %14 : vector<2x1xf32> to vector<2x1x1xf32>
    %16 = vector.broadcast %15 : vector<2x1x1xf32> to vector<2x16x32xf32>
    %17 = arith.addf %5, %16 : vector<2x16x32xf32>
    %18 = math.tanh %17 : vector<2x16x32xf32>
    %19 = vector.shape_cast %10 : vector<1x32xf32> to vector<1x1x32xf32>
    %20 = vector.broadcast %19 : vector<1x1x32xf32> to vector<2x16x32xf32>
    %21 = arith.mulf %18, %20 : vector<2x16x32xf32>
    %cst_13 = arith.constant dense<0.000000e+00> : vector<2x16xf32>
    %22 = vector.multi_reduction <add>, %21, %cst_13 [2] : vector<2x16x32xf32> to vector<2x16xf32>
    %23 = vector.broadcast %9 : vector<1x32xf32> to vector<2x32xf32>
    %24 = arith.mulf %7, %23 : vector<2x32xf32>
    %cst_14 = arith.constant dense<0.000000e+00> : vector<2xf32>
    %25 = vector.multi_reduction <add>, %24, %cst_14 [1] : vector<2x32xf32> to vector<2xf32>
    %26 = vector.shape_cast %25 : vector<2xf32> to vector<2x1xf32>
    %27 = arith.addf %26, %14 : vector<2x1xf32>
    %28 = math.tanh %27 : vector<2x1xf32>
    %cst_15 = arith.constant dense<0xFF800000> : vector<2xf32>
    %29 = vector.multi_reduction <maximumf>, %22, %cst_15 [1] : vector<2x16xf32> to vector<2xf32>
    %30 = vector.shape_cast %29 : vector<2xf32> to vector<2x1xf32>
    %31 = arith.maximumf %30, %28 : vector<2x1xf32>
    %32 = vector.broadcast %31 : vector<2x1xf32> to vector<2x16xf32>
    %33 = arith.subf %22, %32 : vector<2x16xf32>
    %34 = math.exp %33 : vector<2x16xf32>
    %35 = arith.subf %28, %31 : vector<2x1xf32>
    %36 = math.exp %35 : vector<2x1xf32>
    %cst_16 = arith.constant dense<0.000000e+00> : vector<2xf32>
    %37 = vector.multi_reduction <add>, %34, %cst_16 [1] : vector<2x16xf32> to vector<2xf32>
    %38 = vector.shape_cast %37 : vector<2xf32> to vector<2x1xf32>
    %39 = arith.addf %38, %36 : vector<2x1xf32>
    %cst_17 = arith.constant 1.000000e+00 : f32
    %40 = vector.broadcast %cst_17 : f32 to vector<2x1xf32>
    %41 = arith.divf %40, %39 : vector<2x1xf32>
    %42 = vector.broadcast %41 : vector<2x1xf32> to vector<2x16xf32>
    %43 = arith.mulf %34, %42 : vector<2x16xf32>
    %c0_18 = arith.constant 0 : index
    %c0_19 = arith.constant 0 : index
    %44 = vector.load %arg4[%c0_18, %c0_19] : memref<2x17xf32, #tpu.memory_space<vmem>>, vector<2x16xf32>
    tpu.vector_store %arg4[%c0_18, %c0_19], %43 {strides = array<i32>} : memref<2x17xf32, #tpu.memory_space<vmem>>, vector<2x16xf32>,
    %45 = arith.mulf %36, %41 : vector<2x1xf32>
    %c0_20 = arith.constant 0 : index
    %c16 = arith.constant 16 : index
    %46 = vector.load %arg4[%c0_20, %c16] : memref<2x17xf32, #tpu.memory_space<vmem>>, vector<2x1xf32>
    tpu.vector_store %arg4[%c0_20, %c16], %45 {strides = array<i32>} : memref<2x17xf32, #tpu.memory_space<vmem>>, vector<2x1xf32>,
    return
  }
}

</mosaic_0001>

<llo_original>
// kernel: adaptive_attention_2d.1
$region0: #{adaptive_attention_2d.1}
  #allocation0 [shape = 'u32[]', space=smem, size = 0x4, offset = 0x4, fixed_abs, tag = 'smem constant byte address 0x4 - core index']
  #allocation1 [shape = 'u32[144,128]{1,0:T(1,128)}', space=vmem, size = 0x12000, scoped, tag = 'internal scratch']
  %s0 = inlined_call_operand.vmem [shape: f32[2,32,16], index: 0, kind: input, shape index: {}]
  %s1 = inlined_call_operand.vmem [shape: f32[4,32], index: 1, kind: input, shape index: {}]
  %s2 = inlined_call_operand.vmem [shape: f32[32,32], index: 2, kind: input, shape index: {}]
  %s3 = inlined_call_operand.vmem [shape: f32[3,32], index: 3, kind: input, shape index: {}]
  %s4 = inlined_call_operand.hbm [shape: f32[2,17], index: 4, kind: output, shape index: {}]
  %s5 = sld [smem:[#allocation0]]
  $region26: #{adaptive_attention_2d.1} parent=0
    _
  %s7 = ssub.s32 1, %s5
  %s8 = scalar_select 0, %s7, %s5
  $region1: #{adaptive_attention_2d.1} parent=0
    #allocation2 [shape = 'u8[1024]{0}', space=vmem, size = 0x400, scoped, tag = 'output window, operand 0, single buffered']
    #allocation3 [shape = 's32[1]{0}', space=sflag, size = 0x4, scoped, tag = 'scoped memory for adaptive_attention_2d.1']
    %9 = vsyncpa [#allocation3], 0
    // Predicated region
    $region2: #{adaptive_attention_2d.1} parent=1 // pred_check
      _
    $region3: #{adaptive_attention_2d.1} parent=1 // pred_check_branch
      %11 = sbr.rel (0) target = $region5
    $region4: #{adaptive_attention_2d.1} parent=1 // pred_region
      _
    $region5: #{adaptive_attention_2d.1} parent=1 // pred_fallthru
      _
    // Predicated region
    $region6: #{adaptive_attention_2d.1} parent=1 // pred_check
      _
    $region7: #{adaptive_attention_2d.1} parent=1 // pred_check_branch
      %13 = sbr.rel (0) target = $region9
    $region8: #{adaptive_attention_2d.1} parent=1 // pred_region
      _
    $region9: #{adaptive_attention_2d.1} parent=1 // pred_fallthru
      _
    // Predicated region
    $region10: #{adaptive_attention_2d.1} parent=1 // pred_check
      _
    $region11: #{adaptive_attention_2d.1} parent=1 // pred_check_branch
      %15 = sbr.rel (0) target = $region13
    $region12: #{adaptive_attention_2d.1} parent=1 // pred_region
      _
    $region13: #{adaptive_attention_2d.1} parent=1 // pred_fallthru
      _
    // Predicated region
    $region14: #{adaptive_attention_2d.1} parent=1 // pred_check
      _
    $region15: #{adaptive_attention_2d.1} parent=1 // pred_check_branch
      %17 = sbr.rel (0) target = $region17
    $region16: #{adaptive_attention_2d.1} parent=1 // pred_region
      _
    $region17: #{adaptive_attention_2d.1} parent=1 // pred_fallthru
      _
    %v18 = vld [vmem:[%s0] sm:$0xff]
    %v19 = vld [vmem:[%s0 + $0x8] sm:$0xff]
    %v20 = vld [vmem:[%s0 + $0x10] sm:$0xff]
    %v21 = vld [vmem:[%s0 + $0x18] sm:$0xff]
    %v22 = vld [vmem:[%s0 + $0x20] sm:$0xff]
    %v23 = vld [vmem:[%s0 + $0x28] sm:$0xff]
    %v24 = vld [vmem:[%s0 + $0x30] sm:$0xff]
    %v25 = vld [vmem:[%s0 + $0x38] sm:$0xff]
    %26 = vxpose.xlu0.b32.start [1/16] %v18, 128
    %27 = vxpose.xlu0.b32.cont [2/16] %v19, 128
    %28 = vxpose.xlu0.b32.cont [3/16] %v20, 128
    %29 = vxpose.xlu0.b32.cont [4/16] %v21, 128
    %30 = vxpose.xlu0.b32.cont [5/16] 0.0, 128
    %31 = vxpose.xlu0.b32.cont [6/16] 0.0, 128
    %32 = vxpose.xlu0.b32.cont [7/16] 0.0, 128
    %33 = vxpose.xlu0.b32.cont [8/16] 0.0, 128
    %34 = vxpose.xlu0.b32.cont [9/16] 0.0, 128
    %35 = vxpose.xlu0.b32.cont [10/16] 0.0, 128
    %36 = vxpose.xlu0.b32.cont [11/16] 0.0, 128
    %37 = vxpose.xlu0.b32.cont [12/16] 0.0, 128
    %38 = vxpose.xlu0.b32.cont [13/16] 0.0, 128
    %39 = vxpose.xlu0.b32.cont [14/16] 0.0, 128
    %40 = vxpose.xlu0.b32.cont [15/16] 0.0, 128
    %41 = vxpose.xlu0.b32.end [16/16] 0.0, 128
    %v42 = vpop.trf.xlu0
    %v43 = vpop.trf.xlu0
    %v44 = vpop.trf.xlu0
    %v45 = vpop.trf.xlu0
    %v46 = vpop.trf.xlu0
    %v47 = vpop.trf.xlu0
    %v48 = vpop.trf.xlu0
    %v49 = vpop.trf.xlu0
    %v50 = vpop.trf.xlu0
    %v51 = vpop.trf.xlu0
    %v52 = vpop.trf.xlu0
    %v53 = vpop.trf.xlu0
    %v54 = vpop.trf.xlu0
    %v55 = vpop.trf.xlu0
    %v56 = vpop.trf.xlu0
    %v57 = vpop.trf.xlu0
    %58 = vxpose.xlu0.b32.start [1/16] %v22, 128
    %59 = vxpose.xlu0.b32.cont [2/16] %v23, 128
    %60 = vxpose.xlu0.b32.cont [3/16] %v24, 128
    %61 = vxpose.xlu0.b32.cont [4/16] %v25, 128
    %62 = vxpose.xlu0.b32.cont [5/16] 0.0, 128
    %63 = vxpose.xlu0.b32.cont [6/16] 0.0, 128
    %64 = vxpose.xlu0.b32.cont [7/16] 0.0, 128
    %65 = vxpose.xlu0.b32.cont [8/16] 0.0, 128
    %66 = vxpose.xlu0.b32.cont [9/16] 0.0, 128
    %67 = vxpose.xlu0.b32.cont [10/16] 0.0, 128
    %68 = vxpose.xlu0.b32.cont [11/16] 0.0, 128
    %69 = vxpose.xlu0.b32.cont [12/16] 0.0, 128
    %70 = vxpose.xlu0.b32.cont [13/16] 0.0, 128
    %71 = vxpose.xlu0.b32.cont [14/16] 0.0, 128
    %72 = vxpose.xlu0.b32.cont [15/16] 0.0, 128
    %73 = vxpose.xlu0.b32.end [16/16] 0.0, 128
    %v74 = vpop.trf.xlu0
    %v75 = vpop.trf.xlu0
    %v76 = vpop.trf.xlu0
    %v77 = vpop.trf.xlu0
    %v78 = vpop.trf.xlu0
    %v79 = vpop.trf.xlu0
    %v80 = vpop.trf.xlu0
    %v81 = vpop.trf.xlu0
    %v82 = vpop.trf.xlu0
    %v83 = vpop.trf.xlu0
    %v84 = vpop.trf.xlu0
    %v85 = vpop.trf.xlu0
    %v86 = vpop.trf.xlu0
    %v87 = vpop.trf.xlu0
    %v88 = vpop.trf.xlu0
    %v89 = vpop.trf.xlu0
    %v90 = vld [vmem:[%s2] sm:$0xff]
    %v91 = vld [vmem:[%s2 + $0x8] sm:$0xff]
    %v92 = vld [vmem:[%s2 + $0x10] sm:$0xff]
    %v93 = vld [vmem:[%s2 + $0x18] sm:$0xff]
    %vm94 = vcmask 261120
    %v96 = vsel %vm94, %v42, 0
    %v99 = vsel %vm94, %v43, 0
    %v102 = vsel %vm94, %v74, 0
    %v105 = vsel %vm94, %v75, 0
    %v108 = vsel %vm94, %v90, 0
    %v111 = vsel %vm94, %v91, 0
    %v114 = vsel %vm94, %v92, 0
    %v117 = vsel %vm94, %v93, 0
    %119 = vmatprep.subr.mxu0 0.0
    %120 = vmatpush1.xpose.msra.mxu0 0.0
    %121 = vmatprep.subr.mxu0 0.0
    %122 = vmatpush1.xpose.msra.mxu0 0.0
    %123 = vmatprep.subr.mxu0 0.0
    %124 = vmatpush1.xpose.msra.mxu0 0.0
    %125 = vmatprep.subr.mxu0 0.0
    %126 = vmatpush1.xpose.msra.mxu0 0.0
    %127 = vmatprep.subr.mxu0 0.0
    %128 = vmatpush1.xpose.msra.mxu0 0.0
    %129 = vmatprep.subr.mxu0 0.0
    %130 = vmatpush1.xpose.msra.mxu0 0.0
    %131 = vmatprep.subr.mxu0 0.0
    %132 = vmatpush1.xpose.msra.mxu0 0.0
    %133 = vmatprep.subr.mxu0 0.0
    %134 = vmatpush1.xpose.msra.mxu0 0.0
    %135 = vmatprep.subr.mxu0 0.0
    %136 = vmatpush1.xpose.msra.mxu0 0.0
    %137 = vmatprep.subr.mxu0 0.0
    %138 = vmatpush1.xpose.msra.mxu0 0.0
    %139 = vmatprep.subr.mxu0 0.0
    %140 = vmatpush1.xpose.msra.mxu0 0.0
    %141 = vmatprep.subr.mxu0 0.0
    %142 = vmatpush1.xpose.msra.mxu0 0.0
    %143 = vmatprep.subr.mxu0 0.0
    %144 = vmatpush1.xpose.msra.mxu0 %v117
    %145 = vmatprep.subr.mxu0 0.0
    %146 = vmatpush1.xpose.msra.mxu0 %v114
    %147 = vmatprep.subr.mxu0 0.0
    %148 = vmatpush1.xpose.msra.mxu0 %v111
    %149 = vmatprep.subr.mxu0 0.0
    %150 = vmatpush1.xpose.msra.mxu0 %v108
    %151 = vmatprep.subr.mxu0 0.0
    %152 = vmatpush2.xpose.msra.mxu0 0.0
    %153 = vmatprep.subr.mxu0 0.0
    %154 = vmatpush2.xpose.msra.mxu0 0.0
    %155 = vmatprep.subr.mxu0 0.0
    %156 = vmatpush2.xpose.msra.mxu0 0.0
    %157 = vmatprep.subr.mxu0 0.0
    %158 = vmatpush2.xpose.msra.mxu0 0.0
    %159 = vmatprep.subr.mxu0 0.0
    %160 = vmatpush2.xpose.msra.mxu0 0.0
    %161 = vmatprep.subr.mxu0 0.0
    %162 = vmatpush2.xpose.msra.mxu0 0.0
    %163 = vmatprep.subr.mxu0 0.0
    %164 = vmatpush2.xpose.msra.mxu0 0.0
    %165 = vmatprep.subr.mxu0 0.0
    %166 = vmatpush2.xpose.msra.mxu0 0.0
    %167 = vmatprep.subr.mxu0 0.0
    %168 = vmatpush2.xpose.msra.mxu0 0.0
    %169 = vmatprep.subr.mxu0 0.0
    %170 = vmatpush2.xpose.msra.mxu0 0.0
    %171 = vmatprep.subr.mxu0 0.0
    %172 = vmatpush2.xpose.msra.mxu0 0.0
    %173 = vmatprep.subr.mxu0 0.0
    %174 = vmatpush2.xpose.msra.mxu0 0.0
    %175 = vmatprep.subr.mxu0 0.0
    %176 = vmatpush2.xpose.msra.mxu0 0.0
    %177 = vmatprep.subr.mxu0 0.0
    %178 = vmatpush2.xpose.msra.mxu0 0.0
    %179 = vmatprep.subr.mxu0 0.0
    %180 = vmatpush2.xpose.msra.mxu0 0.0
    %181 = vmatprep.subr.mxu0 0.0
    %182 = vmatpush2.xpose.msra.mxu0 0.0
    %183 = vmatprep.mubr.f32.mxu0 0.0
    %184 = vmatmul.mubr.f32.gmra.mxu0 %v96
    %v185 = vpop.f32.mrf.mxu0
    %v186 = vadd.f32 0.0, %v185
    %v187 = vpop.f32.mrf.mxu0
    %188 = vmatprep.mubr.f32.mxu0 0.0
    %189 = vmatmul.mubr.f32.gmra.mxu0 %v99
    %v190 = vpop.f32.mrf.mxu0
    %v191 = vadd.f32 0.0, %v190
    %v192 = vpop.f32.mrf.mxu0
    %193 = vmatprep.mubr.f32.mxu0 0.0
    %194 = vmatmul.mubr.f32.gmra.mxu0 %v102
    %v195 = vpop.f32.mrf.mxu0
    %v196 = vadd.f32 0.0, %v195
    %v197 = vpop.f32.mrf.mxu0
    %198 = vmatprep.mubr.f32.mxu0 0.0
    %199 = vmatmul.mubr.f32.gmra.mxu0 %v105
    %v200 = vpop.f32.mrf.mxu0
    %v201 = vadd.f32 0.0, %v200
    %v202 = vpop.f32.mrf.mxu0
    %203 = vdwg.mxu0
    %v204 = vld [vmem:[%s1] sm:$0x3]
    %v205 = vld [vmem:[%s1 + $0x2] sm:$0x3]
    %v206 = vld [vmem:[%s3] sm:$0x1]
    %v207 = vld [vmem:[%s3 + $0x1] sm:$0x1]
    %v208 = vld [vmem:[%s3 + $0x2] sm:$0x1]
    %v209 = vlaneseq
    %v210 = vshrl.u32 %v209, 7
    %v211 = vsub.s32 0, %v210
    %v212 = vrot.slane %v206, %v211
    %v213 = vmul.f32 %v204, %v212
    %vm214 = vcmask 254976
    %v215 = vsel %vm214, %v213, 0.0
    %216 = vadd.xlane.f32.xlu0 %v215
    %v217 = vpop.xlane.xlu0 %216
    %v219 = vlaneseq
    %v220 = vshrl.u32 %v219, 7
    %v221 = vsub.s32 0, %v220
    %v222 = vrot.slane %v217, %v221
    %v223 = vlaneseq
    %v224 = vshrl.u32 %v223, 7
    %v225 = vsub.s32 1, %v224
    %v226 = vrot.slane %v217, %v225
    %v229 = vadd.f32 %v186, %v222
    %v230 = vadd.f32 %v191, %v222
    %v231 = vadd.f32 %v196, %v226
    %v232 = vadd.f32 %v201, %v226
    %v233 = vtanh.pop %v229
    %v234 = vtanh.pop %v230
    %v235 = vtanh.pop %v231
    %v236 = vtanh.pop %v232
    %v237 = vlaneseq
    %v238 = vshrl.u32 %v237, 7
    %v239 = vsub.s32 0, %v238
    %v240 = vrot.slane %v208, %v239
    %v241 = vmul.f32 %v233, %v240
    %v242 = vmul.f32 %v234, %v240
    %v243 = vmul.f32 %v235, %v240
    %v244 = vmul.f32 %v236, %v240
    %v245 = vsel %vm94, %v241, 0.0
    %246 = vadd.xlane.f32.xlu0 %v245
    %v247 = vpop.xlane.xlu0 %246
    %v248 = vsel %vm94, %v242, 0.0
    %249 = vadd.xlane.f32.xlu0 %v248
    %v250 = vpop.xlane.xlu0 %249
    %v251 = vsel %vm94, %v243, 0.0
    %252 = vadd.xlane.f32.xlu0 %v251
    %v253 = vpop.xlane.xlu0 %252
    %v254 = vsel %vm94, %v244, 0.0
    %255 = vadd.xlane.f32.xlu0 %v254
    %v256 = vpop.xlane.xlu0 %255
    %v257 = vlaneseq
    %v258 = vshrl.u32 %v257, 7
    %v259 = vsub.s32 0, %v258
    %v260 = vrot.slane %v207, %v259
    %v261 = vmul.f32 %v205, %v260
    %v262 = vsel %vm214, %v261, 0.0
    %263 = vadd.xlane.f32.xlu0 %v262
    %v264 = vpop.xlane.xlu0 %263
    %v265 = vadd.f32 %v264, %v217
    %v266 = vtanh.pop %v265
    %v271 = vlaneseq
    %v272 = vand.u32 %v271, 127
    %v273 = vlaneseq
    %v274 = vshrl.u32 %v273, 7
    %v275 = vsub.s32 %v272, %v274
    %v276 = vrot.slane %v247, %v275
    %v277 = vadd.s32 %v272, 4294967288
    %v278 = vlaneseq
    %v279 = vshrl.u32 %v278, 7
    %v280 = vsub.s32 %v277, %v279
    %v281 = vrot.slane %v250, %v280
    %vm282 = vcmask 130112
    %v283 = vsel %vm282, %v281, %v276
    %v284 = vlaneseq
    %v285 = vshrl.u32 %v284, 7
    %v286 = vsub.s32 %v272, %v285
    %v287 = vrot.slane %v253, %v286
    %v288 = vlaneseq
    %v289 = vshrl.u32 %v288, 7
    %v290 = vsub.s32 %v277, %v289
    %v291 = vrot.slane %v256, %v290
    %v292 = vsel %vm282, %v291, %v287
    %vm293 = vcmask 1041409
    %v294 = vsel %vm293, %v292, %v283
    %vm296 = vcmask 123904
    %v297 = vsel %vm296, %v294, -inf
    %298 = vmax.xlane.f32.xlu0 %v297
    %v299 = vpop.xlane.xlu0 %298
    %v300 = vmax.f32 %v299, %v266
    %v302 = vlaneseq
    %v303 = vshrl.u32 %v302, 7
    %v304 = vsub.s32 0, %v303
    %v305 = vrot.slane %v300, %v304
    %v306 = vlaneseq
    %v307 = vshrl.u32 %v306, 7
    %v308 = vsub.s32 1, %v307
    %v309 = vrot.slane %v300, %v308
    %v312 = vsub.f32 %v247, %v305
    %v313 = vsub.f32 %v250, %v305
    %v314 = vsub.f32 %v253, %v309
    %v315 = vsub.f32 %v256, %v309
    %v316 = vmul.f32 %v312, 1.442695
    %v317 = vpow.pop %v316
    %v318 = vmul.f32 %v313, 1.442695
    %v319 = vpow.pop %v318
    %v320 = vmul.f32 %v314, 1.442695
    %v321 = vpow.pop %v320
    %v322 = vmul.f32 %v315, 1.442695
    %v323 = vpow.pop %v322
    %v324 = vsub.f32 %v266, %v300
    %v325 = vmul.f32 %v324, 1.442695
    %v326 = vpow.pop %v325
    %331 = vset.pattern.permute.xlu0 0
    %332 = vperm.xlu0 %331, %v317
    %v333 = vpop.permute.xlu0 %332
    %334 = vset.pattern.permute.xlu0 0
    %335 = vperm.xlu0 %334, %v319
    %v336 = vpop.permute.xlu0 %335
    %337 = vset.pattern.permute.xlu0 0
    %338 = vperm.xlu0 %337, %v321
    %v339 = vpop.permute.xlu0 %338
    %340 = vset.pattern.permute.xlu0 0
    %341 = vperm.xlu0 %340, %v323
    %v342 = vpop.permute.xlu0 %341
    %v343 = vlaneseq
    %v344 = vshrl.u32 %v343, 7
    %v345 = vsub.s32 %v272, %v344
    %v346 = vrot.slane %v333, %v345
    %v347 = vlaneseq
    %v348 = vshrl.u32 %v347, 7
    %v349 = vsub.s32 %v277, %v348
    %v350 = vrot.slane %v336, %v349
    %v351 = vsel %vm282, %v350, %v346
    %v352 = vlaneseq
    %v353 = vshrl.u32 %v352, 7
    %v354 = vsub.s32 %v272, %v353
    %v355 = vrot.slane %v339, %v354
    %v356 = vlaneseq
    %v357 = vshrl.u32 %v356, 7
    %v358 = vsub.s32 %v277, %v357
    %v359 = vrot.slane %v342, %v358
    %v360 = vsel %vm282, %v359, %v355
    %v361 = vsel %vm293, %v360, %v351
    %v363 = vsel %vm296, %v361, 0.0
    %364 = vadd.xlane.f32.xlu0 %v363
    %v365 = vpop.xlane.xlu0 %364
    %v366 = vadd.f32 %v365, %v326
    %v367 = vrcp.pop %v366
    %v368 = vmul.f32 1.0, %v367
    %v370 = vlaneseq
    %v371 = vshrl.u32 %v370, 7
    %v372 = vsub.s32 0, %v371
    %v373 = vrot.slane %v368, %v372
    %v374 = vlaneseq
    %v375 = vshrl.u32 %v374, 7
    %v376 = vsub.s32 1, %v375
    %v377 = vrot.slane %v368, %v376
    %v380 = vmul.f32 %v317, %v373
    %v381 = vmul.f32 %v319, %v373
    %v382 = vmul.f32 %v321, %v377
    %v383 = vmul.f32 %v323, %v377
    %388 = vset.pattern.permute.xlu0 0
    %389 = vperm.xlu0 %388, %v380
    %v390 = vpop.permute.xlu0 %389
    %391 = vset.pattern.permute.xlu0 0
    %392 = vperm.xlu0 %391, %v381
    %v393 = vpop.permute.xlu0 %392
    %394 = vset.pattern.permute.xlu0 0
    %395 = vperm.xlu0 %394, %v382
    %v396 = vpop.permute.xlu0 %395
    %397 = vset.pattern.permute.xlu0 0
    %398 = vperm.xlu0 %397, %v383
    %v399 = vpop.permute.xlu0 %398
    %v400 = vlaneseq
    %v401 = vshrl.u32 %v400, 7
    %v402 = vsub.s32 %v272, %v401
    %v403 = vrot.slane %v390, %v402
    %v404 = vlaneseq
    %v405 = vshrl.u32 %v404, 7
    %v406 = vsub.s32 %v277, %v405
    %v407 = vrot.slane %v393, %v406
    %v408 = vsel %vm282, %v407, %v403
    %v409 = vlaneseq
    %v410 = vshrl.u32 %v409, 7
    %v411 = vsub.s32 %v272, %v410
    %v412 = vrot.slane %v396, %v411
    %v413 = vlaneseq
    %v414 = vshrl.u32 %v413, 7
    %v415 = vsub.s32 %v277, %v414
    %v416 = vrot.slane %v399, %v415
    %v417 = vsel %vm282, %v416, %v412
    %v418 = vsel %vm293, %v417, %v408
    %420 = vst.msk [vmem:[#allocation2] sm:$0x3] %vm296, %v418
    %v421 = vmul.f32 %v326, %v368
    %vm422 = vcmask 132224
    %423 = vst.msk [vmem:[#allocation2] sm:$0x3] %vm422, %v421
    // Predicated region
    $region18: #{adaptive_attention_2d.1} parent=1 // pred_check
      _
    $region19: #{adaptive_attention_2d.1} parent=1 // pred_check_branch
      %425 = sbr.rel (0) target = $region21
    $region20: #{adaptive_attention_2d.1} parent=1 // pred_region
      %s427 = ssub.s32 32, 32
      %428 = vsyncadd [#allocation3], %s427
      %s430 = sshll.u32 [#allocation2], 4
      %s431 = int_to_ptr.vmem [resolvable:$true] %s430
      %433 = dma.vmem_to_hbm [thread:$0]  %s431, 32, %s4, [#allocation3]
    $region21: #{adaptive_attention_2d.1} parent=1 // pred_fallthru
      _
    // Predicated region
    $region22: #{adaptive_attention_2d.1} parent=1 // pred_check
      _
    $region23: #{adaptive_attention_2d.1} parent=1 // pred_check_branch
      %435 = sbr.rel (0) target = $region25
    $region24: #{adaptive_attention_2d.1} parent=1 // pred_region
      %436 = dma.done [#allocation3], 32
    $region25: #{adaptive_attention_2d.1} parent=1 // pred_fallthru
      _
    %437 = vsyncpa [#allocation3], 1

</llo_original>
